<compile_context>
chip_gen: v6e
topology: v6e:2x2x1
jax: 0.10.0
libtpu: 0.0.40
codegen_flags: <defaults>
</compile_context>

<pallas_src>
import functools

import jax
import jax.numpy as jnp
from jax.experimental import pallas as pl
from jax.experimental.pallas import tpu as pltpu

LANE = 128      # vreg lane width  -> pad feature dims to this
SUBLANE = 8     # vreg sublane     -> pad per-ntype node counts to this


def _round_up(x, m):
    return (x + m - 1) // m * m


# ----------------------------- Pallas kernel --------------------------------

def _hetero_rgcn_forward_kernel(a_ref, x_ref, w1_ref, c1_ref, w2_ref, c2_ref,
                                r_ref, wct_ref, bc_ref, o_ref, whs_ref,
                                *, n, ne, d1, d2):
    """Whole HeteroRGCN forward for one packed graph (single invocation).

    a_ref  : (n, ne*n)    lane-concatenated block adjacencies [A_0 | ... ]
    x_ref  : (n, Din)     packed node features (padding rows / lanes = 0)
    w1_ref : (Din, ne*d1) lane-concatenated, pre-transposed layer-1 weights
    c1_ref : (n, d1)      precomputed sum_e deg_e (outer) b1_e
    w2_ref : (d1, ne*d2)  layer-2 weights (same packing)
    c2_ref : (n, d2)      precomputed sum_e deg_e (outer) b2_e
    r_ref  : (n, 1)       readout weights: 1/n_nodes[nt] on real rows, 0 on pad
    wct_ref: (d2, Dcls)   classifier weight, transposed + padded
    bc_ref : (1, Dcls)    classifier bias, padded
    o_ref  : (1, Dcls)    logits (padded)
    whs_ref: (ne*n, max(d1,d2)) VMEM scratch: sublane-stacked per-etype WH
    """
    a = a_ref[...]                                                 # (n, ne*n)

    # ---- layer 1:  h1 = relu( sum_e A_e @ (X @ W1_e^T) + c1 ) --------------
    wh = jnp.dot(x_ref[...], w1_ref[...],
                 preferred_element_type=jnp.float32)               # (n, ne*d1)
    for e in range(ne):           # lane-slab -> sublane-stack (128-aligned)
        whs_ref[e * n:(e + 1) * n, :d1] = wh[:, e * d1:(e + 1) * d1]
    h1 = jnp.dot(a, whs_ref[:, :d1],
                 preferred_element_type=jnp.float32) + c1_ref[...]
    h1 = jnp.maximum(h1, 0.0)

    # ---- layer 2:  h2 = sum_e A_e @ (h1 @ W2_e^T) + c2 ---------------------
    wh = jnp.dot(h1, w2_ref[...],
                 preferred_element_type=jnp.float32)               # (n, ne*d2)
    for e in range(ne):
        whs_ref[e * n:(e + 1) * n, :d2] = wh[:, e * d2:(e + 1) * d2]
    h2 = jnp.dot(a, whs_ref[:, :d2],
                 preferred_element_type=jnp.float32) + c2_ref[...]

    # ---- readout (per-ntype mean + cross-ntype sum) + classifier -----------
    hg = jnp.sum(h2 * r_ref[...], axis=0, keepdims=True)           # (1, d2)
    o_ref[...] = jnp.dot(hg, wct_ref[...],
                         preferred_element_type=jnp.float32) + bc_ref[...]


# ------------------------------ wrapper --------------------------------------

def hetero_rgcn_forward_fused(a_cat, x, w1_cat, c1, w2_cat, c2, r, wct, bc):
    n = a_cat.shape[0]
    ne = a_cat.shape[1] // n
    d1 = w1_cat.shape[1] // ne
    d2 = w2_cat.shape[1] // ne
    cout = wct.shape[1]
    kernel = functools.partial(_hetero_rgcn_forward_kernel,
                               n=n, ne=ne, d1=d1, d2=d2)
    return pl.pallas_call(
        kernel,
        out_shape=jax.ShapeDtypeStruct((1, cout), jnp.float32),
        in_specs=[pl.BlockSpec(memory_space=pltpu.MemorySpace.VMEM)
                  for _ in range(9)],
        out_specs=pl.BlockSpec(memory_space=pltpu.MemorySpace.VMEM),
        scratch_shapes=[pltpu.VMEM((ne * n, max(d1, d2)), jnp.float32)],
    )(a_cat, x, w1_cat, c1, w2_cat, c2, r, wct, bc)


def build_forward(out_size):
    @jax.jit
    def forward(a_cat, x_packed, params):
        logits_pad = hetero_rgcn_forward_fused(
            a_cat, x_packed,
            params["w1"], params["c1"], params["w2"], params["c2"],
            params["readout"], params["wct"], params["bc"])
        return logits_pad[:, :out_size]
    return forward


# ------------------------------- reference ----------------------------------

def reference_forward(graph, params):
    ntypes, canonical_etypes, adj, feat_dict, _ = graph

    def layer(feats, layer_params):
        agg = {nt: None for nt in ntypes}
        for (s, e, d) in canonical_etypes:
            w, b = layer_params[e]
            wh = feats[s] @ w.T + b
            m = adj[(s, e, d)] @ wh
            agg[d] = m if agg[d] is None else agg[d] + m
        return agg

    h = layer(feat_dict, params["layer1"])
    h = {k: jnp.maximum(v, 0.0) for k, v in h.items()}
    h = layer(h, params["layer2"])
    hg = 0.0
    for nt in ntypes:
        hg = hg + jnp.mean(h[nt], axis=0, keepdims=True)
    w_c, b_c = params["classify"]
    return hg @ w_c.T + b_c


# --------------------------------- setup ------------------------------------

def make_linear_params(key, in_size, out_size):
    kw, kb = jax.random.split(key)
    bound = 1.0 / jnp.sqrt(in_size)
    w = jax.random.uniform(kw, (out_size, in_size), jnp.float32, -bound, bound)
    b = jax.random.uniform(kb, (out_size,), jnp.float32, -bound, bound)
    return w, b


if __name__ == "__main__":
    key = jax.random.PRNGKey(0)

    in_size, hidden_size, out_size = 16, 32, 4
    ntypes = ["user", "item", "loan"]
    n_nodes = {"user": 12, "item": 10, "loan": 8}
    canonical_etypes = [
        ("user", "applies", "loan"),
        ("loan", "applied_by", "user"),
        ("user", "owns", "item"),
    ]
    etypes = [e for (_, e, _) in canonical_etypes]
    E = len(canonical_etypes)

    # deterministic synthetic graph + features
    keys = jax.random.split(key, 16)
    feat_dict = {
        nt: jax.random.normal(keys[i], (n_nodes[nt], in_size), jnp.float32)
        for i, nt in enumerate(ntypes)
    }
    adj = {}
    for i, (s, e, d) in enumerate(canonical_etypes):
        adj[(s, e, d)] = jax.random.bernoulli(
            keys[4 + i], 0.3, (n_nodes[d], n_nodes[s])).astype(jnp.float32)

    # deterministic parameters (shapes from HeteroRGCN.__init__)
    pkeys = jax.random.split(keys[10], 2 * E + 1)
    raw_params = {
        "layer1": {e: make_linear_params(pkeys[i], in_size, in_size)
                   for i, e in enumerate(etypes)},
        "layer2": {e: make_linear_params(pkeys[E + i], in_size, hidden_size)
                   for i, e in enumerate(etypes)},
        "classify": make_linear_params(pkeys[-1], hidden_size, out_size),
    }

    # ---- one-time packing / padding (done at init, not per forward) --------
    in_pad = _round_up(in_size, LANE)        # 128
    hid_pad = _round_up(hidden_size, LANE)   # 128
    out_pad = _round_up(out_size, LANE)      # 128

    n_pad = {nt: _round_up(n_nodes[nt], SUBLANE) for nt in ntypes}
    offsets, off = {}, 0
    for nt in ntypes:
        offsets[nt] = off
        off += n_pad[nt]
    N_total = off                            # 16 + 16 + 8 = 40

    # packed node features (padding rows / lanes = 0)
    x_packed = jnp.zeros((N_total, in_pad), jnp.float32)
    for nt in ntypes:
        x_packed = x_packed.at[
            offsets[nt]:offsets[nt] + n_nodes[nt], :in_size].set(feat_dict[nt])

    # lane-concatenated block adjacencies: a_cat[:, e*N:(e+1)*N] is A_e
    # embedded into the packed node index space (padding rows/cols = 0).
    a_cat = jnp.zeros((N_total, E * N_total), jnp.float32)
    for i, (s, e, d) in enumerate(canonical_etypes):
        a_cat = a_cat.at[
            offsets[d]:offsets[d] + n_nodes[d],
            i * N_total + offsets[s]: i * N_total + offsets[s] + n_nodes[s],
        ].set(adj[(s, e, d)])

    def pack_layer(layer_p, din, dout, din_p, dout_p):
        # lane-concatenated, pre-transposed weights: [W_0^T | W_1^T | ...]
        w_cat = jnp.zeros((din_p, E * dout_p), jnp.float32)
        # folded-bias constant: sum_e deg_e (outer) b_e  (zero on padded rows)
        c = jnp.zeros((N_total, dout_p), jnp.float32)
        for i, (s, e, d) in enumerate(canonical_etypes):
            w, b = layer_p[e]
            w_cat = w_cat.at[:din, i * dout_p:i * dout_p + dout].set(w.T)
            deg = jnp.zeros((N_total,), jnp.float32).at[
                offsets[d]:offsets[d] + n_nodes[d]].set(
                    adj[(s, e, d)].sum(axis=1))
            c = c.at[:, :dout].add(deg[:, None] * b[None, :])
        return w_cat, c

    w1_cat, c1 = pack_layer(raw_params["layer1"], in_size, in_size,
                            in_pad, in_pad)
    w2_cat, c2 = pack_layer(raw_params["layer2"], in_size, hidden_size,
                            in_pad, hid_pad)

    # readout column: 1/n_nodes[nt] on real rows of each ntype, 0 on padding
    readout = jnp.zeros((N_total, 1), jnp.float32)
    for nt in ntypes:
        readout = readout.at[
            offsets[nt]:offsets[nt] + n_nodes[nt], 0].set(1.0 / n_nodes[nt])

    wc, bc = raw_params["classify"]
    wct = jnp.zeros((hid_pad, out_pad), jnp.float32).at[
        :hidden_size, :out_size].set(wc.T)
    bcp = jnp.zeros((1, out_pad), jnp.float32).at[0, :out_size].set(bc)

    params = {"w1": w1_cat, "c1": c1, "w2": w2_cat, "c2": c2,
              "readout": readout, "wct": wct, "bc": bcp}

    forward = build_forward(out_size)
    out = forward(a_cat, x_packed, params)
    out = jax.block_until_ready(out)

    graph = (ntypes, canonical_etypes, adj, feat_dict, n_nodes)
    ref = reference_forward(graph, raw_params)

    assert out.shape == (1, out_size), out.shape
    assert jnp.allclose(out, ref, atol=1e-4, rtol=1e-4), (out, ref)

    print("KERNEL_OK")
</pallas_src>

<mosaic_0001>
module attributes {stable_mosaic.version = 11 : i64} {
  func.func @_hetero_rgcn_forward_kernel(%arg0: memref<40x120xf32, #tpu.memory_space<vmem>>, %arg1: memref<40x128xf32, #tpu.memory_space<vmem>>, %arg2: memref<128x384xf32, #tpu.memory_space<vmem>>, %arg3: memref<40x128xf32, #tpu.memory_space<vmem>>, %arg4: memref<128x384xf32, #tpu.memory_space<vmem>>, %arg5: memref<40x128xf32, #tpu.memory_space<vmem>>, %arg6: memref<40x1xf32, #tpu.memory_space<vmem>>, %arg7: memref<128x128xf32, #tpu.memory_space<vmem>>, %arg8: memref<1x128xf32, #tpu.memory_space<vmem>>, %arg9: memref<1x128xf32, #tpu.memory_space<vmem>>, %arg10: memref<120x128xf32, #tpu.memory_space<vmem>>) attributes {dimension_semantics = [], scalar_prefetch = 0 : i64, scratch_operands = 1 : i64, tpu.core_type = #tpu.core_type<tc>} {
    %c0 = arith.constant 0 : index
    %c0_0 = arith.constant 0 : index
    %0 = vector.load %arg0[%c0, %c0_0] : memref<40x120xf32, #tpu.memory_space<vmem>>, vector<40x120xf32>
    %c0_1 = arith.constant 0 : index
    %c0_2 = arith.constant 0 : index
    %1 = vector.load %arg1[%c0_1, %c0_2] : memref<40x128xf32, #tpu.memory_space<vmem>>, vector<40x128xf32>
    %c0_3 = arith.constant 0 : index
    %c0_4 = arith.constant 0 : index
    %2 = vector.load %arg2[%c0_3, %c0_4] : memref<128x384xf32, #tpu.memory_space<vmem>>, vector<128x384xf32>
    %cst = arith.constant dense<0.000000e+00> : vector<40x384xf32>
    %3 = tpu.matmul %1, %2, %cst {dimension_numbers = #tpu.dot_dimension_numbers<[1], [0], [0], [1], [0, 0, 1, 1], [], []>} : vector<40x128xf32>, vector<128x384xf32>, vector<40x384xf32> -> vector<40x384xf32>
    %4 = vector.extract_strided_slice %3 {offsets = [0, 0], sizes = [40, 128], strides = [1, 1]} : vector<40x384xf32> to vector<40x128xf32>
    %c0_5 = arith.constant 0 : index
    %c0_6 = arith.constant 0 : index
    %5 = vector.load %arg10[%c0_5, %c0_6] : memref<120x128xf32, #tpu.memory_space<vmem>>, vector<40x128xf32>
    tpu.vector_store %arg10[%c0_5, %c0_6], %4 {strides = array<i32>} : memref<120x128xf32, #tpu.memory_space<vmem>>, vector<40x128xf32>,
    %6 = vector.extract_strided_slice %3 {offsets = [0, 128], sizes = [40, 128], strides = [1, 1]} : vector<40x384xf32> to vector<40x128xf32>
    %c40 = arith.constant 40 : index
    %c0_7 = arith.constant 0 : index
    %7 = vector.load %arg10[%c40, %c0_7] : memref<120x128xf32, #tpu.memory_space<vmem>>, vector<40x128xf32>
    tpu.vector_store %arg10[%c40, %c0_7], %6 {strides = array<i32>} : memref<120x128xf32, #tpu.memory_space<vmem>>, vector<40x128xf32>,
    %8 = vector.extract_strided_slice %3 {offsets = [0, 256], sizes = [40, 128], strides = [1, 1]} : vector<40x384xf32> to vector<40x128xf32>
    %c80 = arith.constant 80 : index
    %c0_8 = arith.constant 0 : index
    %9 = vector.load %arg10[%c80, %c0_8] : memref<120x128xf32, #tpu.memory_space<vmem>>, vector<40x128xf32>
    tpu.vector_store %arg10[%c80, %c0_8], %8 {strides = array<i32>} : memref<120x128xf32, #tpu.memory_space<vmem>>, vector<40x128xf32>,
    %c0_9 = arith.constant 0 : index
    %c0_10 = arith.constant 0 : index
    %10 = vector.load %arg10[%c0_9, %c0_10] : memref<120x128xf32, #tpu.memory_space<vmem>>, vector<120x128xf32>
    %cst_11 = arith.constant dense<0.000000e+00> : vector<40x128xf32>
    %11 = tpu.matmul %0, %10, %cst_11 {dimension_numbers = #tpu.dot_dimension_numbers<[1], [0], [0], [1], [0, 0, 1, 1], [], []>} : vector<40x120xf32>, vector<120x128xf32>, vector<40x128xf32> -> vector<40x128xf32>
    %c0_12 = arith.constant 0 : index
    %c0_13 = arith.constant 0 : index
    %12 = vector.load %arg3[%c0_12, %c0_13] : memref<40x128xf32, #tpu.memory_space<vmem>>, vector<40x128xf32>
    %13 = arith.addf %11, %12 : vector<40x128xf32>
    %cst_14 = arith.constant 0.000000e+00 : f32
    %14 = vector.broadcast %cst_14 : f32 to vector<40x128xf32>
    %15 = arith.maximumf %13, %14 : vector<40x128xf32>
    %c0_15 = arith.constant 0 : index
    %c0_16 = arith.constant 0 : index
    %16 = vector.load %arg4[%c0_15, %c0_16] : memref<128x384xf32, #tpu.memory_space<vmem>>, vector<128x384xf32>
    %cst_17 = arith.constant dense<0.000000e+00> : vector<40x384xf32>
    %17 = tpu.matmul %15, %16, %cst_17 {dimension_numbers = #tpu.dot_dimension_numbers<[1], [0], [0], [1], [0, 0, 1, 1], [], []>} : vector<40x128xf32>, vector<128x384xf32>, vector<40x384xf32> -> vector<40x384xf32>
    %18 = vector.extract_strided_slice %17 {offsets = [0, 0], sizes = [40, 128], strides = [1, 1]} : vector<40x384xf32> to vector<40x128xf32>
    %c0_18 = arith.constant 0 : index
    %c0_19 = arith.constant 0 : index
    %19 = vector.load %arg10[%c0_18, %c0_19] : memref<120x128xf32, #tpu.memory_space<vmem>>, vector<40x128xf32>
    tpu.vector_store %arg10[%c0_18, %c0_19], %18 {strides = array<i32>} : memref<120x128xf32, #tpu.memory_space<vmem>>, vector<40x128xf32>,
    %20 = vector.extract_strided_slice %17 {offsets = [0, 128], sizes = [40, 128], strides = [1, 1]} : vector<40x384xf32> to vector<40x128xf32>
    %c40_20 = arith.constant 40 : index
    %c0_21 = arith.constant 0 : index
    %21 = vector.load %arg10[%c40_20, %c0_21] : memref<120x128xf32, #tpu.memory_space<vmem>>, vector<40x128xf32>
    tpu.vector_store %arg10[%c40_20, %c0_21], %20 {strides = array<i32>} : memref<120x128xf32, #tpu.memory_space<vmem>>, vector<40x128xf32>,
    %22 = vector.extract_strided_slice %17 {offsets = [0, 256], sizes = [40, 128], strides = [1, 1]} : vector<40x384xf32> to vector<40x128xf32>
    %c80_22 = arith.constant 80 : index
    %c0_23 = arith.constant 0 : index
    %23 = vector.load %arg10[%c80_22, %c0_23] : memref<120x128xf32, #tpu.memory_space<vmem>>, vector<40x128xf32>
    tpu.vector_store %arg10[%c80_22, %c0_23], %22 {strides = array<i32>} : memref<120x128xf32, #tpu.memory_space<vmem>>, vector<40x128xf32>,
    %c0_24 = arith.constant 0 : index
    %c0_25 = arith.constant 0 : index
    %24 = vector.load %arg10[%c0_24, %c0_25] : memref<120x128xf32, #tpu.memory_space<vmem>>, vector<120x128xf32>
    %cst_26 = arith.constant dense<0.000000e+00> : vector<40x128xf32>
    %25 = tpu.matmul %0, %24, %cst_26 {dimension_numbers = #tpu.dot_dimension_numbers<[1], [0], [0], [1], [0, 0, 1, 1], [], []>} : vector<40x120xf32>, vector<120x128xf32>, vector<40x128xf32> -> vector<40x128xf32>
    %c0_27 = arith.constant 0 : index
    %c0_28 = arith.constant 0 : index
    %26 = vector.load %arg5[%c0_27, %c0_28] : memref<40x128xf32, #tpu.memory_space<vmem>>, vector<40x128xf32>
    %27 = arith.addf %25, %26 : vector<40x128xf32>
    %c0_29 = arith.constant 0 : index
    %c0_30 = arith.constant 0 : index
    %28 = vector.load %arg6[%c0_29, %c0_30] : memref<40x1xf32, #tpu.memory_space<vmem>>, vector<40x1xf32>
    %29 = vector.broadcast %28 : vector<40x1xf32> to vector<40x128xf32>
    %30 = arith.mulf %27, %29 : vector<40x128xf32>
    %cst_31 = arith.constant dense<0.000000e+00> : vector<128xf32>
    %31 = vector.multi_reduction <add>, %30, %cst_31 [0] : vector<40x128xf32> to vector<128xf32>
    %32 = vector.shape_cast %31 : vector<128xf32> to vector<1x128xf32>
    %c0_32 = arith.constant 0 : index
    %c0_33 = arith.constant 0 : index
    %33 = vector.load %arg7[%c0_32, %c0_33] : memref<128x128xf32, #tpu.memory_space<vmem>>, vector<128x128xf32>
    %cst_34 = arith.constant dense<0.000000e+00> : vector<1x128xf32>
    %34 = tpu.matmul %32, %33, %cst_34 {dimension_numbers = #tpu.dot_dimension_numbers<[1], [0], [0], [1], [0, 0, 1, 1], [], []>} : vector<1x128xf32>, vector<128x128xf32>, vector<1x128xf32> -> vector<1x128xf32>
    %c0_35 = arith.constant 0 : index
    %c0_36 = arith.constant 0 : index
    %35 = vector.load %arg8[%c0_35, %c0_36] : memref<1x128xf32, #tpu.memory_space<vmem>>, vector<1x128xf32>
    %36 = arith.addf %34, %35 : vector<1x128xf32>
    %c0_37 = arith.constant 0 : index
    %c0_38 = arith.constant 0 : index
    %37 = vector.load %arg9[%c0_37, %c0_38] : memref<1x128xf32, #tpu.memory_space<vmem>>, vector<1x128xf32>
    tpu.vector_store %arg9[%c0_37, %c0_38], %36 {strides = array<i32>} : memref<1x128xf32, #tpu.memory_space<vmem>>, vector<1x128xf32>,
    return
  }
}

</mosaic_0001>

<llo_original>
// kernel: forward.1
$region0: #{forward.1}
  #allocation0 [shape = 'u32[]', space=smem, size = 0x4, offset = 0x4, fixed_abs, tag = 'smem constant byte address 0x4 - core index']
  #allocation1 [shape = 'u32[144,128]{1,0:T(1,128)}', space=vmem, size = 0x12000, scoped, tag = 'internal scratch']
  #allocation2 [shape = 'f32[120,128]{1,0:T(8,128)}', space=vmem, size = 0xf000, scoped, tag = 'scratch operand']
  %s0 = inlined_call_operand.vmem [shape: f32[40,120], index: 0, kind: input, shape index: {}]
  %s1 = inlined_call_operand.hbm [shape: f32[40,128], index: 1, kind: input, shape index: {}]
  %s2 = inlined_call_operand.hbm [shape: f32[128,384], index: 2, kind: input, shape index: {}]
  %s3 = inlined_call_operand.hbm [shape: f32[40,128], index: 3, kind: input, shape index: {}]
  %s4 = inlined_call_operand.hbm [shape: f32[128,384], index: 4, kind: input, shape index: {}]
  %s5 = inlined_call_operand.hbm [shape: f32[40,128], index: 5, kind: input, shape index: {}]
  %s6 = inlined_call_operand.vmem [shape: f32[40,1], index: 6, kind: input, shape index: {}]
  %s7 = inlined_call_operand.hbm [shape: f32[128,128], index: 7, kind: input, shape index: {}]
  %s8 = inlined_call_operand.vmem [shape: f32[1,128], index: 8, kind: input, shape index: {}]
  %s9 = inlined_call_operand.hbm [shape: f32[1,128], index: 9, kind: output, shape index: {}]
  %s10 = sld [smem:[#allocation0]]
  $region70: #{forward.1} parent=0
    _
  %s12 = ssub.s32 1, %s10
  %s13 = scalar_select 0, %s12, %s10
  $region1: #{forward.1} parent=0
    #allocation3 [shape = 'u8[20480]{0}', space=vmem, size = 0x5000, scoped, tag = 'input window, operand 1, single buffered']
    #allocation4 [shape = 's32[1]{0}', space=sflag, size = 0x4, scoped, tag = 'scoped memory for forward.1']
    #allocation5 [shape = 's32[1]{0}', space=sflag, size = 0x4, scoped, tag = 'scoped memory for forward.1']
    #allocation6 [shape = 'u8[196608]{0}', space=vmem, size = 0x30000, scoped, tag = 'input window, operand 2, single buffered']
    #allocation7 [shape = 's32[1]{0}', space=sflag, size = 0x4, scoped, tag = 'scoped memory for forward.1']
    #allocation8 [shape = 'u8[20480]{0}', space=vmem, size = 0x5000, scoped, tag = 'input window, operand 3, single buffered']
    #allocation9 [shape = 'u8[196608]{0}', space=vmem, size = 0x30000, scoped, tag = 'input window, operand 4, single buffered']
    #allocation10 [shape = 's32[1]{0}', space=sflag, size = 0x4, scoped, tag = 'scoped memory for forward.1']
    #allocation11 [shape = 'u8[20480]{0}', space=vmem, size = 0x5000, scoped, tag = 'input window, operand 5, single buffered']
    #allocation12 [shape = 'u8[65536]{0}', space=vmem, size = 0x10000, scoped, tag = 'input window, operand 7, single buffered']
    #allocation13 [shape = 's32[1]{0}', space=sflag, size = 0x4, scoped, tag = 'scoped memory for forward.1']
    #allocation14 [shape = 'u8[512]{0}', space=vmem, size = 0x400, scoped, tag = 'output window, operand 0, single buffered']
    %14 = vsyncpa [#allocation4], 0
    %15 = vsyncpa [#allocation7], 0
    %16 = vsyncpa [#allocation10], 0
    %17 = vsyncpa [#allocation13], 0
    %18 = vsyncpa [#allocation5], 0
    // Predicated region
    $region2: #{forward.1} parent=1 // pred_check
      _
    $region3: #{forward.1} parent=1 // pred_check_branch
      %20 = sbr.rel (0) target = $region5
    $region4: #{forward.1} parent=1 // pred_region
      _
    $region5: #{forward.1} parent=1 // pred_fallthru
      _
    // Predicated region
    $region6: #{forward.1} parent=1 // pred_check
      _
    $region7: #{forward.1} parent=1 // pred_check_branch
      %22 = sbr.rel (0) target = $region9
    $region8: #{forward.1} parent=1 // pred_region
      %s24 = ssub.s32 640, 640
      %25 = vsyncadd [#allocation4], %s24
      %s26 = sshll.u32 [#allocation3], 4
      %s27 = int_to_ptr.vmem [resolvable:$true] %s26
      %32 = dma.hbm_to_vmem [thread:$0]  %s1, 640, %s27, [#allocation4], 128, 128, 8
    $region9: #{forward.1} parent=1 // pred_fallthru
      _
    // Predicated region
    $region10: #{forward.1} parent=1 // pred_check
      _
    $region11: #{forward.1} parent=1 // pred_check_branch
      %34 = sbr.rel (0) target = $region13
    $region12: #{forward.1} parent=1 // pred_region
      %s36 = ssub.s32 6144, 6144
      %37 = vsyncadd [#allocation7], %s36
      %s38 = sshll.u32 [#allocation6], 4
      %s39 = int_to_ptr.vmem [resolvable:$true] %s38
      %44 = dma.hbm_to_vmem [thread:$0]  %s2, 6144, %s39, [#allocation7], 384, 384, 24
    $region13: #{forward.1} parent=1 // pred_fallthru
      _
    // Predicated region
    $region14: #{forward.1} parent=1 // pred_check
      _
    $region15: #{forward.1} parent=1 // pred_check_branch
      %46 = sbr.rel (0) target = $region17
    $region16: #{forward.1} parent=1 // pred_region
      %s48 = ssub.s32 640, 640
      %49 = vsyncadd [#allocation7], %s48
      %s50 = sshll.u32 [#allocation8], 4
      %s51 = int_to_ptr.vmem [resolvable:$true] %s50
      %56 = dma.hbm_to_vmem [thread:$0]  %s3, 640, %s51, [#allocation7], 128, 128, 8
    $region17: #{forward.1} parent=1 // pred_fallthru
      _
    // Predicated region
    $region18: #{forward.1} parent=1 // pred_check
      _
    $region19: #{forward.1} parent=1 // pred_check_branch
      %58 = sbr.rel (0) target = $region21
    $region20: #{forward.1} parent=1 // pred_region
      %s60 = ssub.s32 6144, 6144
      %61 = vsyncadd [#allocation10], %s60
      %s62 = sshll.u32 [#allocation9], 4
      %s63 = int_to_ptr.vmem [resolvable:$true] %s62
      %68 = dma.hbm_to_vmem [thread:$0]  %s4, 6144, %s63, [#allocation10], 384, 384, 24
    $region21: #{forward.1} parent=1 // pred_fallthru
      _
    // Predicated region
    $region22: #{forward.1} parent=1 // pred_check
      _
    $region23: #{forward.1} parent=1 // pred_check_branch
      %70 = sbr.rel (0) target = $region25
    $region24: #{forward.1} parent=1 // pred_region
      %s72 = ssub.s32 640, 640
      %73 = vsyncadd [#allocation10], %s72
      %s74 = sshll.u32 [#allocation11], 4
      %s75 = int_to_ptr.vmem [resolvable:$true] %s74
      %80 = dma.hbm_to_vmem [thread:$0]  %s5, 640, %s75, [#allocation10], 128, 128, 8
    $region25: #{forward.1} parent=1 // pred_fallthru
      _
    // Predicated region
    $region26: #{forward.1} parent=1 // pred_check
      _
    $region27: #{forward.1} parent=1 // pred_check_branch
      %82 = sbr.rel (0) target = $region29
    $region28: #{forward.1} parent=1 // pred_region
      _
    $region29: #{forward.1} parent=1 // pred_fallthru
      _
    // Predicated region
    $region30: #{forward.1} parent=1 // pred_check
      _
    $region31: #{forward.1} parent=1 // pred_check_branch
      %84 = sbr.rel (0) target = $region33
    $region32: #{forward.1} parent=1 // pred_region
      %s86 = ssub.s32 2048, 2048
      %87 = vsyncadd [#allocation13], %s86
      %s88 = sshll.u32 [#allocation12], 4
      %s89 = int_to_ptr.vmem [resolvable:$true] %s88
      %94 = dma.hbm_to_vmem [thread:$0]  %s7, 2048, %s89, [#allocation13], 128, 128, 8
    $region33: #{forward.1} parent=1 // pred_fallthru
      _
    // Predicated region
    $region34: #{forward.1} parent=1 // pred_check
      _
    $region35: #{forward.1} parent=1 // pred_check_branch
      %96 = sbr.rel (0) target = $region37
    $region36: #{forward.1} parent=1 // pred_region
      _
    $region37: #{forward.1} parent=1 // pred_fallthru
      _
    // Predicated region
    $region38: #{forward.1} parent=1 // pred_check
      _
    $region39: #{forward.1} parent=1 // pred_check_branch
      %98 = sbr.rel (0) target = $region41
    $region40: #{forward.1} parent=1 // pred_region
      %99 = dma.done [#allocation4], 640
    $region41: #{forward.1} parent=1 // pred_fallthru
      _
    // Predicated region
    $region42: #{forward.1} parent=1 // pred_check
      _
    $region43: #{forward.1} parent=1 // pred_check_branch
      %101 = sbr.rel (0) target = $region45
    $region44: #{forward.1} parent=1 // pred_region
      %102 = dma.done [#allocation7], 6144
    $region45: #{forward.1} parent=1 // pred_fallthru
      _
    // Predicated region
    $region46: #{forward.1} parent=1 // pred_check
      _
    $region47: #{forward.1} parent=1 // pred_check_branch
      %104 = sbr.rel (0) target = $region49
    $region48: #{forward.1} parent=1 // pred_region
      %105 = dma.done [#allocation7], 640
    $region49: #{forward.1} parent=1 // pred_fallthru
      _
    // Predicated region
    $region50: #{forward.1} parent=1 // pred_check
      _
    $region51: #{forward.1} parent=1 // pred_check_branch
      %107 = sbr.rel (0) target = $region53
    $region52: #{forward.1} parent=1 // pred_region
      %108 = dma.done [#allocation10], 6144
    $region53: #{forward.1} parent=1 // pred_fallthru
      _
    // Predicated region
    $region54: #{forward.1} parent=1 // pred_check
      _
    $region55: #{forward.1} parent=1 // pred_check_branch
      %110 = sbr.rel (0) target = $region57
    $region56: #{forward.1} parent=1 // pred_region
      %111 = dma.done [#allocation10], 640
    $region57: #{forward.1} parent=1 // pred_fallthru
      _
    // Predicated region
    $region58: #{forward.1} parent=1 // pred_check
      _
    $region59: #{forward.1} parent=1 // pred_check_branch
      %113 = sbr.rel (0) target = $region61
    $region60: #{forward.1} parent=1 // pred_region
      %114 = dma.done [#allocation13], 2048
    $region61: #{forward.1} parent=1 // pred_fallthru
      _
    %v115 = vld [vmem:[%s0] sm:$0xff]
    %v116 = vld [vmem:[%s0 + $0x8] sm:$0xff]
    %v117 = vld [vmem:[%s0 + $0x10] sm:$0xff]
    %v118 = vld [vmem:[%s0 + $0x18] sm:$0xff]
    %v119 = vld [vmem:[%s0 + $0x20] sm:$0xff]
    %v120 = vld [vmem:[#allocation3] sm:$0xff]
    %v121 = vld [vmem:[#allocation3 + $0x8] sm:$0xff]
    %v122 = vld [vmem:[#allocation3 + $0x10] sm:$0xff]
    %v123 = vld [vmem:[#allocation3 + $0x18] sm:$0xff]
    %v124 = vld [vmem:[#allocation3 + $0x20] sm:$0xff]
    %v125 = vld [vmem:[#allocation6] sm:$0xff]
    %v126 = vld [vmem:[#allocation6 + $0x8] sm:$0xff]
    %v127 = vld [vmem:[#allocation6 + $0x10] sm:$0xff]
    %v128 = vld [vmem:[#allocation6 + $0x18] sm:$0xff]
    %v129 = vld [vmem:[#allocation6 + $0x20] sm:$0xff]
    %v130 = vld [vmem:[#allocation6 + $0x28] sm:$0xff]
    %v131 = vld [vmem:[#allocation6 + $0x30] sm:$0xff]
    %v132 = vld [vmem:[#allocation6 + $0x38] sm:$0xff]
    %v133 = vld [vmem:[#allocation6 + $0x40] sm:$0xff]
    %v134 = vld [vmem:[#allocation6 + $0x48] sm:$0xff]
    %v135 = vld [vmem:[#allocation6 + $0x50] sm:$0xff]
    %v136 = vld [vmem:[#allocation6 + $0x58] sm:$0xff]
    %v137 = vld [vmem:[#allocation6 + $0x60] sm:$0xff]
    %v138 = vld [vmem:[#allocation6 + $0x68] sm:$0xff]
    %v139 = vld [vmem:[#allocation6 + $0x70] sm:$0xff]
    %v140 = vld [vmem:[#allocation6 + $0x78] sm:$0xff]
    %v141 = vld [vmem:[#allocation6 + $0x80] sm:$0xff]
    %v142 = vld [vmem:[#allocation6 + $0x88] sm:$0xff]
    %v143 = vld [vmem:[#allocation6 + $0x90] sm:$0xff]
    %v144 = vld [vmem:[#allocation6 + $0x98] sm:$0xff]
    %v145 = vld [vmem:[#allocation6 + $0xa0] sm:$0xff]
    %v146 = vld [vmem:[#allocation6 + $0xa8] sm:$0xff]
    %v147 = vld [vmem:[#allocation6 + $0xb0] sm:$0xff]
    %v148 = vld [vmem:[#allocation6 + $0xb8] sm:$0xff]
    %v149 = vld [vmem:[#allocation6 + $0xc0] sm:$0xff]
    %v150 = vld [vmem:[#allocation6 + $0xc8] sm:$0xff]
    %v151 = vld [vmem:[#allocation6 + $0xd0] sm:$0xff]
    %v152 = vld [vmem:[#allocation6 + $0xd8] sm:$0xff]
    %v153 = vld [vmem:[#allocation6 + $0xe0] sm:$0xff]
    %v154 = vld [vmem:[#allocation6 + $0xe8] sm:$0xff]
    %v155 = vld [vmem:[#allocation6 + $0xf0] sm:$0xff]
    %v156 = vld [vmem:[#allocation6 + $0xf8] sm:$0xff]
    %v157 = vld [vmem:[#allocation6 + $0x100] sm:$0xff]
    %v158 = vld [vmem:[#allocation6 + $0x108] sm:$0xff]
    %v159 = vld [vmem:[#allocation6 + $0x110] sm:$0xff]
    %v160 = vld [vmem:[#allocation6 + $0x118] sm:$0xff]
    %v161 = vld [vmem:[#allocation6 + $0x120] sm:$0xff]
    %v162 = vld [vmem:[#allocation6 + $0x128] sm:$0xff]
    %v163 = vld [vmem:[#allocation6 + $0x130] sm:$0xff]
    %v164 = vld [vmem:[#allocation6 + $0x138] sm:$0xff]
    %v165 = vld [vmem:[#allocation6 + $0x140] sm:$0xff]
    %v166 = vld [vmem:[#allocation6 + $0x148] sm:$0xff]
    %v167 = vld [vmem:[#allocation6 + $0x150] sm:$0xff]
    %v168 = vld [vmem:[#allocation6 + $0x158] sm:$0xff]
    %v169 = vld [vmem:[#allocation6 + $0x160] sm:$0xff]
    %v170 = vld [vmem:[#allocation6 + $0x168] sm:$0xff]
    %v171 = vld [vmem:[#allocation6 + $0x170] sm:$0xff]
    %v172 = vld [vmem:[#allocation6 + $0x178] sm:$0xff]
    %173 = vmatprep.subr.mxu0 %v171
    %174 = vmatpush1.msra.mxu0 %v170
    %175 = vmatprep.subr.mxu0 %v168
    %176 = vmatpush1.msra.mxu0 %v167
    %177 = vmatprep.subr.mxu0 %v165
    %178 = vmatpush1.msra.mxu0 %v164
    %179 = vmatprep.subr.mxu0 %v162
    %180 = vmatpush1.msra.mxu0 %v161
    %181 = vmatprep.subr.mxu0 %v159
    %182 = vmatpush1.msra.mxu0 %v158
    %183 = vmatprep.subr.mxu0 %v156
    %184 = vmatpush1.msra.mxu0 %v155
    %185 = vmatprep.subr.mxu0 %v153
    %186 = vmatpush1.msra.mxu0 %v152
    %187 = vmatprep.subr.mxu0 %v150
    %188 = vmatpush1.msra.mxu0 %v149
    %189 = vmatprep.subr.mxu0 %v147
    %190 = vmatpush1.msra.mxu0 %v146
    %191 = vmatprep.subr.mxu0 %v144
    %192 = vmatpush1.msra.mxu0 %v143
    %193 = vmatprep.subr.mxu0 %v141
    %194 = vmatpush1.msra.mxu0 %v140
    %195 = vmatprep.subr.mxu0 %v138
    %196 = vmatpush1.msra.mxu0 %v137
    %197 = vmatprep.subr.mxu0 %v135
    %198 = vmatpush1.msra.mxu0 %v134
    %199 = vmatprep.subr.mxu0 %v132
    %200 = vmatpush1.msra.mxu0 %v131
    %201 = vmatprep.subr.mxu0 %v129
    %202 = vmatpush1.msra.mxu0 %v128
    %203 = vmatprep.subr.mxu0 %v126
    %204 = vmatpush1.msra.mxu0 %v125
    %205 = vmatprep.subr.mxu0 0.0
    %206 = vmatpush2.msra.mxu0 0.0
    %207 = vmatprep.subr.mxu0 0.0
    %208 = vmatpush2.msra.mxu0 0.0
    %209 = vmatprep.subr.mxu0 0.0
    %210 = vmatpush2.msra.mxu0 0.0
    %211 = vmatprep.subr.mxu0 0.0
    %212 = vmatpush2.msra.mxu0 0.0
    %213 = vmatprep.subr.mxu0 0.0
    %214 = vmatpush2.msra.mxu0 0.0
    %215 = vmatprep.subr.mxu0 0.0
    %216 = vmatpush2.msra.mxu0 0.0
    %217 = vmatprep.subr.mxu0 0.0
    %218 = vmatpush2.msra.mxu0 0.0
    %219 = vmatprep.subr.mxu0 0.0
    %220 = vmatpush2.msra.mxu0 0.0
    %221 = vmatprep.subr.mxu0 0.0
    %222 = vmatpush2.msra.mxu0 0.0
    %223 = vmatprep.subr.mxu0 0.0
    %224 = vmatpush2.msra.mxu0 0.0
    %225 = vmatprep.subr.mxu0 0.0
    %226 = vmatpush2.msra.mxu0 0.0
    %227 = vmatprep.subr.mxu0 0.0
    %228 = vmatpush2.msra.mxu0 0.0
    %229 = vmatprep.subr.mxu0 0.0
    %230 = vmatpush2.msra.mxu0 0.0
    %231 = vmatprep.subr.mxu0 0.0
    %232 = vmatpush2.msra.mxu0 0.0
    %233 = vmatprep.subr.mxu0 0.0
    %234 = vmatpush2.msra.mxu0 0.0
    %235 = vmatprep.subr.mxu0 0.0
    %236 = vmatpush2.msra.mxu0 0.0
    %237 = vmatprep.mubr.f32.mxu0 0.0
    %238 = vmatmul.mubr.f32.gmra.mxu0 %v120
    %v239 = vpop.f32.mrf.mxu0
    %v240 = vadd.f32 0.0, %v239
    %v241 = vpop.f32.mrf.mxu0
    %v242 = vadd.f32 0.0, %v241
    %243 = vmatprep.mubr.f32.mxu0 0.0
    %244 = vmatmul.mubr.f32.gmra.mxu0 %v121
    %v245 = vpop.f32.mrf.mxu0
    %v246 = vadd.f32 0.0, %v245
    %v247 = vpop.f32.mrf.mxu0
    %v248 = vadd.f32 0.0, %v247
    %249 = vmatprep.mubr.f32.mxu0 0.0
    %250 = vmatmul.mubr.f32.gmra.mxu0 %v122
    %v251 = vpop.f32.mrf.mxu0
    %v252 = vadd.f32 0.0, %v251
    %v253 = vpop.f32.mrf.mxu0
    %v254 = vadd.f32 0.0, %v253
    %255 = vmatprep.mubr.f32.mxu0 0.0
    %256 = vmatmul.mubr.f32.gmra.mxu0 %v123
    %v257 = vpop.f32.mrf.mxu0
    %v258 = vadd.f32 0.0, %v257
    %v259 = vpop.f32.mrf.mxu0
    %v260 = vadd.f32 0.0, %v259
    %261 = vmatprep.mubr.f32.mxu0 0.0
    %262 = vmatmul.mubr.f32.gmra.mxu0 %v124
    %v263 = vpop.f32.mrf.mxu0
    %v264 = vadd.f32 0.0, %v263
    %v265 = vpop.f32.mrf.mxu0
    %v266 = vadd.f32 0.0, %v265
    %267 = vdwg.mxu0
    %268 = vmatprep.subr.mxu0 0.0
    %269 = vmatpush1.msra.mxu0 %v172
    %270 = vmatprep.subr.mxu0 0.0
    %271 = vmatpush1.msra.mxu0 %v169
    %272 = vmatprep.subr.mxu0 0.0
    %273 = vmatpush1.msra.mxu0 %v166
    %274 = vmatprep.subr.mxu0 0.0
    %275 = vmatpush1.msra.mxu0 %v163
    %276 = vmatprep.subr.mxu0 0.0
    %277 = vmatpush1.msra.mxu0 %v160
    %278 = vmatprep.subr.mxu0 0.0
    %279 = vmatpush1.msra.mxu0 %v157
    %280 = vmatprep.subr.mxu0 0.0
    %281 = vmatpush1.msra.mxu0 %v154
    %282 = vmatprep.subr.mxu0 0.0
    %283 = vmatpush1.msra.mxu0 %v151
    %284 = vmatprep.subr.mxu0 0.0
    %285 = vmatpush1.msra.mxu0 %v148
    %286 = vmatprep.subr.mxu0 0.0
    %287 = vmatpush1.msra.mxu0 %v145
    %288 = vmatprep.subr.mxu0 0.0
    %289 = vmatpush1.msra.mxu0 %v142
    %290 = vmatprep.subr.mxu0 0.0
    %291 = vmatpush1.msra.mxu0 %v139
    %292 = vmatprep.subr.mxu0 0.0
    %293 = vmatpush1.msra.mxu0 %v136
    %294 = vmatprep.subr.mxu0 0.0
    %295 = vmatpush1.msra.mxu0 %v133
    %296 = vmatprep.subr.mxu0 0.0
    %297 = vmatpush1.msra.mxu0 %v130
    %298 = vmatprep.subr.mxu0 0.0
    %299 = vmatpush1.msra.mxu0 %v127
    %300 = vmatprep.subr.mxu0 0.0
    %301 = vmatpush2.msra.mxu0 0.0
    %302 = vmatprep.subr.mxu0 0.0
    %303 = vmatpush2.msra.mxu0 0.0
    %304 = vmatprep.subr.mxu0 0.0
    %305 = vmatpush2.msra.mxu0 0.0
    %306 = vmatprep.subr.mxu0 0.0
    %307 = vmatpush2.msra.mxu0 0.0
    %308 = vmatprep.subr.mxu0 0.0
    %309 = vmatpush2.msra.mxu0 0.0
    %310 = vmatprep.subr.mxu0 0.0
    %311 = vmatpush2.msra.mxu0 0.0
    %312 = vmatprep.subr.mxu0 0.0
    %313 = vmatpush2.msra.mxu0 0.0
    %314 = vmatprep.subr.mxu0 0.0
    %315 = vmatpush2.msra.mxu0 0.0
    %316 = vmatprep.subr.mxu0 0.0
    %317 = vmatpush2.msra.mxu0 0.0
    %318 = vmatprep.subr.mxu0 0.0
    %319 = vmatpush2.msra.mxu0 0.0
    %320 = vmatprep.subr.mxu0 0.0
    %321 = vmatpush2.msra.mxu0 0.0
    %322 = vmatprep.subr.mxu0 0.0
    %323 = vmatpush2.msra.mxu0 0.0
    %324 = vmatprep.subr.mxu0 0.0
    %325 = vmatpush2.msra.mxu0 0.0
    %326 = vmatprep.subr.mxu0 0.0
    %327 = vmatpush2.msra.mxu0 0.0
    %328 = vmatprep.subr.mxu0 0.0
    %329 = vmatpush2.msra.mxu0 0.0
    %330 = vmatprep.subr.mxu0 0.0
    %331 = vmatpush2.msra.mxu0 0.0
    %332 = vmatprep.mubr.f32.mxu0 0.0
    %333 = vmatmul.mubr.f32.gmra.mxu0 %v120
    %v334 = vpop.f32.mrf.mxu0
    %v335 = vadd.f32 0.0, %v334
    %v336 = vpop.f32.mrf.mxu0
    %337 = vmatprep.mubr.f32.mxu0 0.0
    %338 = vmatmul.mubr.f32.gmra.mxu0 %v121
    %v339 = vpop.f32.mrf.mxu0
    %v340 = vadd.f32 0.0, %v339
    %v341 = vpop.f32.mrf.mxu0
    %342 = vmatprep.mubr.f32.mxu0 0.0
    %343 = vmatmul.mubr.f32.gmra.mxu0 %v122
    %v344 = vpop.f32.mrf.mxu0
    %v345 = vadd.f32 0.0, %v344
    %v346 = vpop.f32.mrf.mxu0
    %347 = vmatprep.mubr.f32.mxu0 0.0
    %348 = vmatmul.mubr.f32.gmra.mxu0 %v123
    %v349 = vpop.f32.mrf.mxu0
    %v350 = vadd.f32 0.0, %v349
    %v351 = vpop.f32.mrf.mxu0
    %352 = vmatprep.mubr.f32.mxu0 0.0
    %353 = vmatmul.mubr.f32.gmra.mxu0 %v124
    %v354 = vpop.f32.mrf.mxu0
    %v355 = vadd.f32 0.0, %v354
    %v356 = vpop.f32.mrf.mxu0
    %357 = vdwg.mxu0
    %358 = vst [vmem:[#allocation2] sm:$0xff] %v240
    %359 = vst [vmem:[#allocation2 + $0x8] sm:$0xff] %v246
    %360 = vst [vmem:[#allocation2 + $0x10] sm:$0xff] %v252
    %361 = vst [vmem:[#allocation2 + $0x18] sm:$0xff] %v258
    %362 = vst [vmem:[#allocation2 + $0x20] sm:$0xff] %v264
    %363 = vst [vmem:[#allocation2 + $0x28] sm:$0xff] %v242
    %364 = vst [vmem:[#allocation2 + $0x30] sm:$0xff] %v248
    %365 = vst [vmem:[#allocation2 + $0x38] sm:$0xff] %v254
    %366 = vst [vmem:[#allocation2 + $0x40] sm:$0xff] %v260
    %367 = vst [vmem:[#allocation2 + $0x48] sm:$0xff] %v266
    %368 = vst [vmem:[#allocation2 + $0x50] sm:$0xff] %v335
    %369 = vst [vmem:[#allocation2 + $0x58] sm:$0xff] %v340
    %370 = vst [vmem:[#allocation2 + $0x60] sm:$0xff] %v345
    %371 = vst [vmem:[#allocation2 + $0x68] sm:$0xff] %v350
    %372 = vst [vmem:[#allocation2 + $0x70] sm:$0xff] %v355
    %v373 = vld [vmem:[#allocation2] sm:$0xff]
    %v374 = vld [vmem:[#allocation2 + $0x8] sm:$0xff]
    %v375 = vld [vmem:[#allocation2 + $0x10] sm:$0xff]
    %v376 = vld [vmem:[#allocation2 + $0x18] sm:$0xff]
    %v377 = vld [vmem:[#allocation2 + $0x20] sm:$0xff]
    %v378 = vld [vmem:[#allocation2 + $0x28] sm:$0xff]
    %v379 = vld [vmem:[#allocation2 + $0x30] sm:$0xff]
    %v380 = vld [vmem:[#allocation2 + $0x38] sm:$0xff]
    %v381 = vld [vmem:[#allocation2 + $0x40] sm:$0xff]
    %v382 = vld [vmem:[#allocation2 + $0x48] sm:$0xff]
    %v383 = vld [vmem:[#allocation2 + $0x50] sm:$0xff]
    %v384 = vld [vmem:[#allocation2 + $0x58] sm:$0xff]
    %v385 = vld [vmem:[#allocation2 + $0x60] sm:$0xff]
    %v386 = vld [vmem:[#allocation2 + $0x68] sm:$0xff]
    %v387 = vld [vmem:[#allocation2 + $0x70] sm:$0xff]
    %v388 = vld [vmem:[#allocation8] sm:$0xff]
    %v389 = vld [vmem:[#allocation8 + $0x8] sm:$0xff]
    %v390 = vld [vmem:[#allocation8 + $0x10] sm:$0xff]
    %v391 = vld [vmem:[#allocation8 + $0x18] sm:$0xff]
    %v392 = vld [vmem:[#allocation8 + $0x20] sm:$0xff]
    %vm393 = vcmask 982016
    %v395 = vsel %vm393, %v115, 0
    %v398 = vsel %vm393, %v116, 0
    %v401 = vsel %vm393, %v117, 0
    %v404 = vsel %vm393, %v118, 0
    %v407 = vsel %vm393, %v119, 0
    %409 = vmatprep.subr.mxu0 0.0
    %410 = vmatpush1.msra.mxu0 0.0
    %411 = vmatprep.subr.mxu0 0.0
    %412 = vmatpush1.msra.mxu0 %v387
    %413 = vmatprep.subr.mxu0 0.0
    %414 = vmatpush1.msra.mxu0 %v386
    %415 = vmatprep.subr.mxu0 0.0
    %416 = vmatpush1.msra.mxu0 %v385
    %417 = vmatprep.subr.mxu0 0.0
    %418 = vmatpush1.msra.mxu0 %v384
    %419 = vmatprep.subr.mxu0 0.0
    %420 = vmatpush1.msra.mxu0 %v383
    %421 = vmatprep.subr.mxu0 0.0
    %422 = vmatpush1.msra.mxu0 %v382
    %423 = vmatprep.subr.mxu0 0.0
    %424 = vmatpush1.msra.mxu0 %v381
    %425 = vmatprep.subr.mxu0 0.0
    %426 = vmatpush1.msra.mxu0 %v380
    %427 = vmatprep.subr.mxu0 0.0
    %428 = vmatpush1.msra.mxu0 %v379
    %429 = vmatprep.subr.mxu0 0.0
    %430 = vmatpush1.msra.mxu0 %v378
    %431 = vmatprep.subr.mxu0 0.0
    %432 = vmatpush1.msra.mxu0 %v377
    %433 = vmatprep.subr.mxu0 0.0
    %434 = vmatpush1.msra.mxu0 %v376
    %435 = vmatprep.subr.mxu0 0.0
    %436 = vmatpush1.msra.mxu0 %v375
    %437 = vmatprep.subr.mxu0 0.0
    %438 = vmatpush1.msra.mxu0 %v374
    %439 = vmatprep.subr.mxu0 0.0
    %440 = vmatpush1.msra.mxu0 %v373
    %441 = vmatprep.subr.mxu0 0.0
    %442 = vmatpush2.msra.mxu0 0.0
    %443 = vmatprep.subr.mxu0 0.0
    %444 = vmatpush2.msra.mxu0 0.0
    %445 = vmatprep.subr.mxu0 0.0
    %446 = vmatpush2.msra.mxu0 0.0
    %447 = vmatprep.subr.mxu0 0.0
    %448 = vmatpush2.msra.mxu0 0.0
    %449 = vmatprep.subr.mxu0 0.0
    %450 = vmatpush2.msra.mxu0 0.0
    %451 = vmatprep.subr.mxu0 0.0
    %452 = vmatpush2.msra.mxu0 0.0
    %453 = vmatprep.subr.mxu0 0.0
    %454 = vmatpush2.msra.mxu0 0.0
    %455 = vmatprep.subr.mxu0 0.0
    %456 = vmatpush2.msra.mxu0 0.0
    %457 = vmatprep.subr.mxu0 0.0
    %458 = vmatpush2.msra.mxu0 0.0
    %459 = vmatprep.subr.mxu0 0.0
    %460 = vmatpush2.msra.mxu0 0.0
    %461 = vmatprep.subr.mxu0 0.0
    %462 = vmatpush2.msra.mxu0 0.0
    %463 = vmatprep.subr.mxu0 0.0
    %464 = vmatpush2.msra.mxu0 0.0
    %465 = vmatprep.subr.mxu0 0.0
    %466 = vmatpush2.msra.mxu0 0.0
    %467 = vmatprep.subr.mxu0 0.0
    %468 = vmatpush2.msra.mxu0 0.0
    %469 = vmatprep.subr.mxu0 0.0
    %470 = vmatpush2.msra.mxu0 0.0
    %471 = vmatprep.subr.mxu0 0.0
    %472 = vmatpush2.msra.mxu0 0.0
    %473 = vmatprep.mubr.f32.mxu0 0.0
    %474 = vmatmul.mubr.f32.gmra.mxu0 %v395
    %v475 = vpop.f32.mrf.mxu0
    %v476 = vadd.f32 %v388, %v475
    %v477 = vpop.f32.mrf.mxu0
    %478 = vmatprep.mubr.f32.mxu0 0.0
    %479 = vmatmul.mubr.f32.gmra.mxu0 %v398
    %v480 = vpop.f32.mrf.mxu0
    %v481 = vadd.f32 %v389, %v480
    %v482 = vpop.f32.mrf.mxu0
    %483 = vmatprep.mubr.f32.mxu0 0.0
    %484 = vmatmul.mubr.f32.gmra.mxu0 %v401
    %v485 = vpop.f32.mrf.mxu0
    %v486 = vadd.f32 %v390, %v485
    %v487 = vpop.f32.mrf.mxu0
    %488 = vmatprep.mubr.f32.mxu0 0.0
    %489 = vmatmul.mubr.f32.gmra.mxu0 %v404
    %v490 = vpop.f32.mrf.mxu0
    %v491 = vadd.f32 %v391, %v490
    %v492 = vpop.f32.mrf.mxu0
    %493 = vmatprep.mubr.f32.mxu0 0.0
    %494 = vmatmul.mubr.f32.gmra.mxu0 %v407
    %v495 = vpop.f32.mrf.mxu0
    %v496 = vadd.f32 %v392, %v495
    %v497 = vpop.f32.mrf.mxu0
    %498 = vdwg.mxu0
    %v499 = vmax.f32 %v476, 0.0
    %v500 = vmax.f32 %v481, 0.0
    %v501 = vmax.f32 %v486, 0.0
    %v502 = vmax.f32 %v491, 0.0
    %v503 = vmax.f32 %v496, 0.0
    %v504 = vld [vmem:[#allocation9] sm:$0xff]
    %v505 = vld [vmem:[#allocation9 + $0x8] sm:$0xff]
    %v506 = vld [vmem:[#allocation9 + $0x10] sm:$0xff]
    %v507 = vld [vmem:[#allocation9 + $0x18] sm:$0xff]
    %v508 = vld [vmem:[#allocation9 + $0x20] sm:$0xff]
    %v509 = vld [vmem:[#allocation9 + $0x28] sm:$0xff]
    %v510 = vld [vmem:[#allocation9 + $0x30] sm:$0xff]
    %v511 = vld [vmem:[#allocation9 + $0x38] sm:$0xff]
    %v512 = vld [vmem:[#allocation9 + $0x40] sm:$0xff]
    %v513 = vld [vmem:[#allocation9 + $0x48] sm:$0xff]
    %v514 = vld [vmem:[#allocation9 + $0x50] sm:$0xff]
    %v515 = vld [vmem:[#allocation9 + $0x58] sm:$0xff]
    %v516 = vld [vmem:[#allocation9 + $0x60] sm:$0xff]
    %v517 = vld [vmem:[#allocation9 + $0x68] sm:$0xff]
    %v518 = vld [vmem:[#allocation9 + $0x70] sm:$0xff]
    %v519 = vld [vmem:[#allocation9 + $0x78] sm:$0xff]
    %v520 = vld [vmem:[#allocation9 + $0x80] sm:$0xff]
    %v521 = vld [vmem:[#allocation9 + $0x88] sm:$0xff]
    %v522 = vld [vmem:[#allocation9 + $0x90] sm:$0xff]
    %v523 = vld [vmem:[#allocation9 + $0x98] sm:$0xff]
    %v524 = vld [vmem:[#allocation9 + $0xa0] sm:$0xff]
    %v525 = vld [vmem:[#allocation9 + $0xa8] sm:$0xff]
    %v526 = vld [vmem:[#allocation9 + $0xb0] sm:$0xff]
    %v527 = vld [vmem:[#allocation9 + $0xb8] sm:$0xff]
    %v528 = vld [vmem:[#allocation9 + $0xc0] sm:$0xff]
    %v529 = vld [vmem:[#allocation9 + $0xc8] sm:$0xff]
    %v530 = vld [vmem:[#allocation9 + $0xd0] sm:$0xff]
    %v531 = vld [vmem:[#allocation9 + $0xd8] sm:$0xff]
    %v532 = vld [vmem:[#allocation9 + $0xe0] sm:$0xff]
    %v533 = vld [vmem:[#allocation9 + $0xe8] sm:$0xff]
    %v534 = vld [vmem:[#allocation9 + $0xf0] sm:$0xff]
    %v535 = vld [vmem:[#allocation9 + $0xf8] sm:$0xff]
    %v536 = vld [vmem:[#allocation9 + $0x100] sm:$0xff]
    %v537 = vld [vmem:[#allocation9 + $0x108] sm:$0xff]
    %v538 = vld [vmem:[#allocation9 + $0x110] sm:$0xff]
    %v539 = vld [vmem:[#allocation9 + $0x118] sm:$0xff]
    %v540 = vld [vmem:[#allocation9 + $0x120] sm:$0xff]
    %v541 = vld [vmem:[#allocation9 + $0x128] sm:$0xff]
    %v542 = vld [vmem:[#allocation9 + $0x130] sm:$0xff]
    %v543 = vld [vmem:[#allocation9 + $0x138] sm:$0xff]
    %v544 = vld [vmem:[#allocation9 + $0x140] sm:$0xff]
    %v545 = vld [vmem:[#allocation9 + $0x148] sm:$0xff]
    %v546 = vld [vmem:[#allocation9 + $0x150] sm:$0xff]
    %v547 = vld [vmem:[#allocation9 + $0x158] sm:$0xff]
    %v548 = vld [vmem:[#allocation9 + $0x160] sm:$0xff]
    %v549 = vld [vmem:[#allocation9 + $0x168] sm:$0xff]
    %v550 = vld [vmem:[#allocation9 + $0x170] sm:$0xff]
    %v551 = vld [vmem:[#allocation9 + $0x178] sm:$0xff]
    %552 = vmatprep.subr.mxu0 %v550
    %553 = vmatpush1.msra.mxu0 %v549
    %554 = vmatprep.subr.mxu0 %v547
    %555 = vmatpush1.msra.mxu0 %v546
    %556 = vmatprep.subr.mxu0 %v544
    %557 = vmatpush1.msra.mxu0 %v543
    %558 = vmatprep.subr.mxu0 %v541
    %559 = vmatpush1.msra.mxu0 %v540
    %560 = vmatprep.subr.mxu0 %v538
    %561 = vmatpush1.msra.mxu0 %v537
    %562 = vmatprep.subr.mxu0 %v535
    %563 = vmatpush1.msra.mxu0 %v534
    %564 = vmatprep.subr.mxu0 %v532
    %565 = vmatpush1.msra.mxu0 %v531
    %566 = vmatprep.subr.mxu0 %v529
    %567 = vmatpush1.msra.mxu0 %v528
    %568 = vmatprep.subr.mxu0 %v526
    %569 = vmatpush1.msra.mxu0 %v525
    %570 = vmatprep.subr.mxu0 %v523
    %571 = vmatpush1.msra.mxu0 %v522
    %572 = vmatprep.subr.mxu0 %v520
    %573 = vmatpush1.msra.mxu0 %v519
    %574 = vmatprep.subr.mxu0 %v517
    %575 = vmatpush1.msra.mxu0 %v516
    %576 = vmatprep.subr.mxu0 %v514
    %577 = vmatpush1.msra.mxu0 %v513
    %578 = vmatprep.subr.mxu0 %v511
    %579 = vmatpush1.msra.mxu0 %v510
    %580 = vmatprep.subr.mxu0 %v508
    %581 = vmatpush1.msra.mxu0 %v507
    %582 = vmatprep.subr.mxu0 %v505
    %583 = vmatpush1.msra.mxu0 %v504
    %584 = vmatprep.subr.mxu0 0.0
    %585 = vmatpush2.msra.mxu0 0.0
    %586 = vmatprep.subr.mxu0 0.0
    %587 = vmatpush2.msra.mxu0 0.0
    %588 = vmatprep.subr.mxu0 0.0
    %589 = vmatpush2.msra.mxu0 0.0
    %590 = vmatprep.subr.mxu0 0.0
    %591 = vmatpush2.msra.mxu0 0.0
    %592 = vmatprep.subr.mxu0 0.0
    %593 = vmatpush2.msra.mxu0 0.0
    %594 = vmatprep.subr.mxu0 0.0
    %595 = vmatpush2.msra.mxu0 0.0
    %596 = vmatprep.subr.mxu0 0.0
    %597 = vmatpush2.msra.mxu0 0.0
    %598 = vmatprep.subr.mxu0 0.0
    %599 = vmatpush2.msra.mxu0 0.0
    %600 = vmatprep.subr.mxu0 0.0
    %601 = vmatpush2.msra.mxu0 0.0
    %602 = vmatprep.subr.mxu0 0.0
    %603 = vmatpush2.msra.mxu0 0.0
    %604 = vmatprep.subr.mxu0 0.0
    %605 = vmatpush2.msra.mxu0 0.0
    %606 = vmatprep.subr.mxu0 0.0
    %607 = vmatpush2.msra.mxu0 0.0
    %608 = vmatprep.subr.mxu0 0.0
    %609 = vmatpush2.msra.mxu0 0.0
    %610 = vmatprep.subr.mxu0 0.0
    %611 = vmatpush2.msra.mxu0 0.0
    %612 = vmatprep.subr.mxu0 0.0
    %613 = vmatpush2.msra.mxu0 0.0
    %614 = vmatprep.subr.mxu0 0.0
    %615 = vmatpush2.msra.mxu0 0.0
    %616 = vmatprep.mubr.f32.mxu0 0.0
    %617 = vmatmul.mubr.f32.gmra.mxu0 %v499
    %v618 = vpop.f32.mrf.mxu0
    %v619 = vadd.f32 0.0, %v618
    %v620 = vpop.f32.mrf.mxu0
    %v621 = vadd.f32 0.0, %v620
    %622 = vmatprep.mubr.f32.mxu0 0.0
    %623 = vmatmul.mubr.f32.gmra.mxu0 %v500
    %v624 = vpop.f32.mrf.mxu0
    %v625 = vadd.f32 0.0, %v624
    %v626 = vpop.f32.mrf.mxu0
    %v627 = vadd.f32 0.0, %v626
    %628 = vmatprep.mubr.f32.mxu0 0.0
    %629 = vmatmul.mubr.f32.gmra.mxu0 %v501
    %v630 = vpop.f32.mrf.mxu0
    %v631 = vadd.f32 0.0, %v630
    %v632 = vpop.f32.mrf.mxu0
    %v633 = vadd.f32 0.0, %v632
    %634 = vmatprep.mubr.f32.mxu0 0.0
    %635 = vmatmul.mubr.f32.gmra.mxu0 %v502
    %v636 = vpop.f32.mrf.mxu0
    %v637 = vadd.f32 0.0, %v636
    %v638 = vpop.f32.mrf.mxu0
    %v639 = vadd.f32 0.0, %v638
    %640 = vmatprep.mubr.f32.mxu0 0.0
    %641 = vmatmul.mubr.f32.gmra.mxu0 %v503
    %v642 = vpop.f32.mrf.mxu0
    %v643 = vadd.f32 0.0, %v642
    %v644 = vpop.f32.mrf.mxu0
    %v645 = vadd.f32 0.0, %v644
    %646 = vdwg.mxu0
    %647 = vmatprep.subr.mxu0 0.0
    %648 = vmatpush1.msra.mxu0 %v551
    %649 = vmatprep.subr.mxu0 0.0
    %650 = vmatpush1.msra.mxu0 %v548
    %651 = vmatprep.subr.mxu0 0.0
    %652 = vmatpush1.msra.mxu0 %v545
    %653 = vmatprep.subr.mxu0 0.0
    %654 = vmatpush1.msra.mxu0 %v542
    %655 = vmatprep.subr.mxu0 0.0
    %656 = vmatpush1.msra.mxu0 %v539
    %657 = vmatprep.subr.mxu0 0.0
    %658 = vmatpush1.msra.mxu0 %v536
    %659 = vmatprep.subr.mxu0 0.0
    %660 = vmatpush1.msra.mxu0 %v533
    %661 = vmatprep.subr.mxu0 0.0
    %662 = vmatpush1.msra.mxu0 %v530
    %663 = vmatprep.subr.mxu0 0.0
    %664 = vmatpush1.msra.mxu0 %v527
    %665 = vmatprep.subr.mxu0 0.0
    %666 = vmatpush1.msra.mxu0 %v524
    %667 = vmatprep.subr.mxu0 0.0
    %668 = vmatpush1.msra.mxu0 %v521
    %669 = vmatprep.subr.mxu0 0.0
    %670 = vmatpush1.msra.mxu0 %v518
    %671 = vmatprep.subr.mxu0 0.0
    %672 = vmatpush1.msra.mxu0 %v515
    %673 = vmatprep.subr.mxu0 0.0
    %674 = vmatpush1.msra.mxu0 %v512
    %675 = vmatprep.subr.mxu0 0.0
    %676 = vmatpush1.msra.mxu0 %v509
    %677 = vmatprep.subr.mxu0 0.0
    %678 = vmatpush1.msra.mxu0 %v506
    %679 = vmatprep.subr.mxu0 0.0
    %680 = vmatpush2.msra.mxu0 0.0
    %681 = vmatprep.subr.mxu0 0.0
    %682 = vmatpush2.msra.mxu0 0.0
    %683 = vmatprep.subr.mxu0 0.0
    %684 = vmatpush2.msra.mxu0 0.0
    %685 = vmatprep.subr.mxu0 0.0
    %686 = vmatpush2.msra.mxu0 0.0
    %687 = vmatprep.subr.mxu0 0.0
    %688 = vmatpush2.msra.mxu0 0.0
    %689 = vmatprep.subr.mxu0 0.0
    %690 = vmatpush2.msra.mxu0 0.0
    %691 = vmatprep.subr.mxu0 0.0
    %692 = vmatpush2.msra.mxu0 0.0
    %693 = vmatprep.subr.mxu0 0.0
    %694 = vmatpush2.msra.mxu0 0.0
    %695 = vmatprep.subr.mxu0 0.0
    %696 = vmatpush2.msra.mxu0 0.0
    %697 = vmatprep.subr.mxu0 0.0
    %698 = vmatpush2.msra.mxu0 0.0
    %699 = vmatprep.subr.mxu0 0.0
    %700 = vmatpush2.msra.mxu0 0.0
    %701 = vmatprep.subr.mxu0 0.0
    %702 = vmatpush2.msra.mxu0 0.0
    %703 = vmatprep.subr.mxu0 0.0
    %704 = vmatpush2.msra.mxu0 0.0
    %705 = vmatprep.subr.mxu0 0.0
    %706 = vmatpush2.msra.mxu0 0.0
    %707 = vmatprep.subr.mxu0 0.0
    %708 = vmatpush2.msra.mxu0 0.0
    %709 = vmatprep.subr.mxu0 0.0
    %710 = vmatpush2.msra.mxu0 0.0
    %711 = vmatprep.mubr.f32.mxu0 0.0
    %712 = vmatmul.mubr.f32.gmra.mxu0 %v499
    %v713 = vpop.f32.mrf.mxu0
    %v714 = vadd.f32 0.0, %v713
    %v715 = vpop.f32.mrf.mxu0
    %716 = vmatprep.mubr.f32.mxu0 0.0
    %717 = vmatmul.mubr.f32.gmra.mxu0 %v500
    %v718 = vpop.f32.mrf.mxu0
    %v719 = vadd.f32 0.0, %v718
    %v720 = vpop.f32.mrf.mxu0
    %721 = vmatprep.mubr.f32.mxu0 0.0
    %722 = vmatmul.mubr.f32.gmra.mxu0 %v501
    %v723 = vpop.f32.mrf.mxu0
    %v724 = vadd.f32 0.0, %v723
    %v725 = vpop.f32.mrf.mxu0
    %726 = vmatprep.mubr.f32.mxu0 0.0
    %727 = vmatmul.mubr.f32.gmra.mxu0 %v502
    %v728 = vpop.f32.mrf.mxu0
    %v729 = vadd.f32 0.0, %v728
    %v730 = vpop.f32.mrf.mxu0
    %731 = vmatprep.mubr.f32.mxu0 0.0
    %732 = vmatmul.mubr.f32.gmra.mxu0 %v503
    %v733 = vpop.f32.mrf.mxu0
    %v734 = vadd.f32 0.0, %v733
    %v735 = vpop.f32.mrf.mxu0
    %736 = vdwg.mxu0
    %737 = vst [vmem:[#allocation2] sm:$0xff] %v619
    %738 = vst [vmem:[#allocation2 + $0x8] sm:$0xff] %v625
    %739 = vst [vmem:[#allocation2 + $0x10] sm:$0xff] %v631
    %740 = vst [vmem:[#allocation2 + $0x18] sm:$0xff] %v637
    %741 = vst [vmem:[#allocation2 + $0x20] sm:$0xff] %v643
    %742 = vst [vmem:[#allocation2 + $0x28] sm:$0xff] %v621
    %743 = vst [vmem:[#allocation2 + $0x30] sm:$0xff] %v627
    %744 = vst [vmem:[#allocation2 + $0x38] sm:$0xff] %v633
    %745 = vst [vmem:[#allocation2 + $0x40] sm:$0xff] %v639
    %746 = vst [vmem:[#allocation2 + $0x48] sm:$0xff] %v645
    %747 = vst [vmem:[#allocation2 + $0x50] sm:$0xff] %v714
    %748 = vst [vmem:[#allocation2 + $0x58] sm:$0xff] %v719
    %749 = vst [vmem:[#allocation2 + $0x60] sm:$0xff] %v724
    %750 = vst [vmem:[#allocation2 + $0x68] sm:$0xff] %v729
    %751 = vst [vmem:[#allocation2 + $0x70] sm:$0xff] %v734
    %v752 = vld [vmem:[#allocation2] sm:$0xff]
    %v753 = vld [vmem:[#allocation2 + $0x8] sm:$0xff]
    %v754 = vld [vmem:[#allocation2 + $0x10] sm:$0xff]
    %v755 = vld [vmem:[#allocation2 + $0x18] sm:$0xff]
    %v756 = vld [vmem:[#allocation2 + $0x20] sm:$0xff]
    %v757 = vld [vmem:[#allocation2 + $0x28] sm:$0xff]
    %v758 = vld [vmem:[#allocation2 + $0x30] sm:$0xff]
    %v759 = vld [vmem:[#allocation2 + $0x38] sm:$0xff]
    %v760 = vld [vmem:[#allocation2 + $0x40] sm:$0xff]
    %v761 = vld [vmem:[#allocation2 + $0x48] sm:$0xff]
    %v762 = vld [vmem:[#allocation2 + $0x50] sm:$0xff]
    %v763 = vld [vmem:[#allocation2 + $0x58] sm:$0xff]
    %v764 = vld [vmem:[#allocation2 + $0x60] sm:$0xff]
    %v765 = vld [vmem:[#allocation2 + $0x68] sm:$0xff]
    %v766 = vld [vmem:[#allocation2 + $0x70] sm:$0xff]
    %v767 = vld [vmem:[#allocation11] sm:$0xff]
    %v768 = vld [vmem:[#allocation11 + $0x8] sm:$0xff]
    %v769 = vld [vmem:[#allocation11 + $0x10] sm:$0xff]
    %v770 = vld [vmem:[#allocation11 + $0x18] sm:$0xff]
    %v771 = vld [vmem:[#allocation11 + $0x20] sm:$0xff]
    %772 = vmatprep.subr.mxu0 0.0
    %773 = vmatpush1.msra.mxu0 0.0
    %774 = vmatprep.subr.mxu0 0.0
    %775 = vmatpush1.msra.mxu0 %v766
    %776 = vmatprep.subr.mxu0 0.0
    %777 = vmatpush1.msra.mxu0 %v765
    %778 = vmatprep.subr.mxu0 0.0
    %779 = vmatpush1.msra.mxu0 %v764
    %780 = vmatprep.subr.mxu0 0.0
    %781 = vmatpush1.msra.mxu0 %v763
    %782 = vmatprep.subr.mxu0 0.0
    %783 = vmatpush1.msra.mxu0 %v762
    %784 = vmatprep.subr.mxu0 0.0
    %785 = vmatpush1.msra.mxu0 %v761
    %786 = vmatprep.subr.mxu0 0.0
    %787 = vmatpush1.msra.mxu0 %v760
    %788 = vmatprep.subr.mxu0 0.0
    %789 = vmatpush1.msra.mxu0 %v759
    %790 = vmatprep.subr.mxu0 0.0
    %791 = vmatpush1.msra.mxu0 %v758
    %792 = vmatprep.subr.mxu0 0.0
    %793 = vmatpush1.msra.mxu0 %v757
    %794 = vmatprep.subr.mxu0 0.0
    %795 = vmatpush1.msra.mxu0 %v756
    %796 = vmatprep.subr.mxu0 0.0
    %797 = vmatpush1.msra.mxu0 %v755
    %798 = vmatprep.subr.mxu0 0.0
    %799 = vmatpush1.msra.mxu0 %v754
    %800 = vmatprep.subr.mxu0 0.0
    %801 = vmatpush1.msra.mxu0 %v753
    %802 = vmatprep.subr.mxu0 0.0
    %803 = vmatpush1.msra.mxu0 %v752
    %804 = vmatprep.subr.mxu0 0.0
    %805 = vmatpush2.msra.mxu0 0.0
    %806 = vmatprep.subr.mxu0 0.0
    %807 = vmatpush2.msra.mxu0 0.0
    %808 = vmatprep.subr.mxu0 0.0
    %809 = vmatpush2.msra.mxu0 0.0
    %810 = vmatprep.subr.mxu0 0.0
    %811 = vmatpush2.msra.mxu0 0.0
    %812 = vmatprep.subr.mxu0 0.0
    %813 = vmatpush2.msra.mxu0 0.0
    %814 = vmatprep.subr.mxu0 0.0
    %815 = vmatpush2.msra.mxu0 0.0
    %816 = vmatprep.subr.mxu0 0.0
    %817 = vmatpush2.msra.mxu0 0.0
    %818 = vmatprep.subr.mxu0 0.0
    %819 = vmatpush2.msra.mxu0 0.0
    %820 = vmatprep.subr.mxu0 0.0
    %821 = vmatpush2.msra.mxu0 0.0
    %822 = vmatprep.subr.mxu0 0.0
    %823 = vmatpush2.msra.mxu0 0.0
    %824 = vmatprep.subr.mxu0 0.0
    %825 = vmatpush2.msra.mxu0 0.0
    %826 = vmatprep.subr.mxu0 0.0
    %827 = vmatpush2.msra.mxu0 0.0
    %828 = vmatprep.subr.mxu0 0.0
    %829 = vmatpush2.msra.mxu0 0.0
    %830 = vmatprep.subr.mxu0 0.0
    %831 = vmatpush2.msra.mxu0 0.0
    %832 = vmatprep.subr.mxu0 0.0
    %833 = vmatpush2.msra.mxu0 0.0
    %834 = vmatprep.subr.mxu0 0.0
    %835 = vmatpush2.msra.mxu0 0.0
    %836 = vmatprep.mubr.f32.mxu0 0.0
    %837 = vmatmul.mubr.f32.gmra.mxu0 %v395
    %v838 = vpop.f32.mrf.mxu0
    %v839 = vadd.f32 %v767, %v838
    %v840 = vpop.f32.mrf.mxu0
    %841 = vmatprep.mubr.f32.mxu0 0.0
    %842 = vmatmul.mubr.f32.gmra.mxu0 %v398
    %v843 = vpop.f32.mrf.mxu0
    %v844 = vadd.f32 %v768, %v843
    %v845 = vpop.f32.mrf.mxu0
    %846 = vmatprep.mubr.f32.mxu0 0.0
    %847 = vmatmul.mubr.f32.gmra.mxu0 %v401
    %v848 = vpop.f32.mrf.mxu0
    %v849 = vadd.f32 %v769, %v848
    %v850 = vpop.f32.mrf.mxu0
    %851 = vmatprep.mubr.f32.mxu0 0.0
    %852 = vmatmul.mubr.f32.gmra.mxu0 %v404
    %v853 = vpop.f32.mrf.mxu0
    %v854 = vadd.f32 %v770, %v853
    %v855 = vpop.f32.mrf.mxu0
    %856 = vmatprep.mubr.f32.mxu0 0.0
    %857 = vmatmul.mubr.f32.gmra.mxu0 %v407
    %v858 = vpop.f32.mrf.mxu0
    %v859 = vadd.f32 %v771, %v858
    %v860 = vpop.f32.mrf.mxu0
    %861 = vdwg.mxu0
    %v862 = vld [vmem:[%s6] sm:$0xff]
    %v863 = vld [vmem:[%s6 + $0x8] sm:$0xff]
    %v864 = vld [vmem:[%s6 + $0x10] sm:$0xff]
    %v865 = vld [vmem:[%s6 + $0x18] sm:$0xff]
    %v866 = vld [vmem:[%s6 + $0x20] sm:$0xff]
    %868 = vset.pattern.permute.xlu0 0
    %869 = vperm.xlu0 %868, %v862
    %v870 = vpop.permute.xlu0 %869
    %873 = vset.pattern.permute.xlu0 0
    %874 = vperm.xlu0 %873, %v863
    %v875 = vpop.permute.xlu0 %874
    %878 = vset.pattern.permute.xlu0 0
    %879 = vperm.xlu0 %878, %v864
    %v880 = vpop.permute.xlu0 %879
    %883 = vset.pattern.permute.xlu0 0
    %884 = vperm.xlu0 %883, %v865
    %v885 = vpop.permute.xlu0 %884
    %888 = vset.pattern.permute.xlu0 0
    %889 = vperm.xlu0 %888, %v866
    %v890 = vpop.permute.xlu0 %889
    %v892 = vmul.f32 %v839, %v870
    %v893 = vmul.f32 %v844, %v875
    %v894 = vmul.f32 %v849, %v880
    %v895 = vmul.f32 %v854, %v885
    %v896 = vmul.f32 %v859, %v890
    %v897 = vadd.f32 %v892, %v893
    %v898 = vadd.f32 %v897, %v894
    %v899 = vadd.f32 %v898, %v895
    %v900 = vadd.f32 %v899, %v896
    %v901 = vrot.slane %v900, 4
    %v902 = vadd.f32 %v900, %v901
    %v903 = vrot.slane %v902, 2
    %v904 = vadd.f32 %v902, %v903
    %v905 = vrot.slane %v904, 1
    %v906 = vadd.f32 %v904, %v905
    %v907 = vld [vmem:[#allocation12] sm:$0xff]
    %v908 = vld [vmem:[#allocation12 + $0x8] sm:$0xff]
    %v909 = vld [vmem:[#allocation12 + $0x10] sm:$0xff]
    %v910 = vld [vmem:[#allocation12 + $0x18] sm:$0xff]
    %v911 = vld [vmem:[#allocation12 + $0x20] sm:$0xff]
    %v912 = vld [vmem:[#allocation12 + $0x28] sm:$0xff]
    %v913 = vld [vmem:[#allocation12 + $0x30] sm:$0xff]
    %v914 = vld [vmem:[#allocation12 + $0x38] sm:$0xff]
    %v915 = vld [vmem:[#allocation12 + $0x40] sm:$0xff]
    %v916 = vld [vmem:[#allocation12 + $0x48] sm:$0xff]
    %v917 = vld [vmem:[#allocation12 + $0x50] sm:$0xff]
    %v918 = vld [vmem:[#allocation12 + $0x58] sm:$0xff]
    %v919 = vld [vmem:[#allocation12 + $0x60] sm:$0xff]
    %v920 = vld [vmem:[#allocation12 + $0x68] sm:$0xff]
    %v921 = vld [vmem:[#allocation12 + $0x70] sm:$0xff]
    %v922 = vld [vmem:[#allocation12 + $0x78] sm:$0xff]
    %v923 = vld [vmem:[%s8] sm:$0x1]
    %924 = vmatprep.subr.mxu0 0.0
    %925 = vmatpush1.msra.mxu0 %v922
    %926 = vmatprep.subr.mxu0 0.0
    %927 = vmatpush1.msra.mxu0 %v921
    %928 = vmatprep.subr.mxu0 0.0
    %929 = vmatpush1.msra.mxu0 %v920
    %930 = vmatprep.subr.mxu0 0.0
    %931 = vmatpush1.msra.mxu0 %v919
    %932 = vmatprep.subr.mxu0 0.0
    %933 = vmatpush1.msra.mxu0 %v918
    %934 = vmatprep.subr.mxu0 0.0
    %935 = vmatpush1.msra.mxu0 %v917
    %936 = vmatprep.subr.mxu0 0.0
    %937 = vmatpush1.msra.mxu0 %v916
    %938 = vmatprep.subr.mxu0 0.0
    %939 = vmatpush1.msra.mxu0 %v915
    %940 = vmatprep.subr.mxu0 0.0
    %941 = vmatpush1.msra.mxu0 %v914
    %942 = vmatprep.subr.mxu0 0.0
    %943 = vmatpush1.msra.mxu0 %v913
    %944 = vmatprep.subr.mxu0 0.0
    %945 = vmatpush1.msra.mxu0 %v912
    %946 = vmatprep.subr.mxu0 0.0
    %947 = vmatpush1.msra.mxu0 %v911
    %948 = vmatprep.subr.mxu0 0.0
    %949 = vmatpush1.msra.mxu0 %v910
    %950 = vmatprep.subr.mxu0 0.0
    %951 = vmatpush1.msra.mxu0 %v909
    %952 = vmatprep.subr.mxu0 0.0
    %953 = vmatpush1.msra.mxu0 %v908
    %954 = vmatprep.subr.mxu0 0.0
    %955 = vmatpush1.msra.mxu0 %v907
    %956 = vmatprep.subr.mxu0 0.0
    %957 = vmatpush2.msra.mxu0 0.0
    %958 = vmatprep.subr.mxu0 0.0
    %959 = vmatpush2.msra.mxu0 0.0
    %960 = vmatprep.subr.mxu0 0.0
    %961 = vmatpush2.msra.mxu0 0.0
    %962 = vmatprep.subr.mxu0 0.0
    %963 = vmatpush2.msra.mxu0 0.0
    %964 = vmatprep.subr.mxu0 0.0
    %965 = vmatpush2.msra.mxu0 0.0
    %966 = vmatprep.subr.mxu0 0.0
    %967 = vmatpush2.msra.mxu0 0.0
    %968 = vmatprep.subr.mxu0 0.0
    %969 = vmatpush2.msra.mxu0 0.0
    %970 = vmatprep.subr.mxu0 0.0
    %971 = vmatpush2.msra.mxu0 0.0
    %972 = vmatprep.subr.mxu0 0.0
    %973 = vmatpush2.msra.mxu0 0.0
    %974 = vmatprep.subr.mxu0 0.0
    %975 = vmatpush2.msra.mxu0 0.0
    %976 = vmatprep.subr.mxu0 0.0
    %977 = vmatpush2.msra.mxu0 0.0
    %978 = vmatprep.subr.mxu0 0.0
    %979 = vmatpush2.msra.mxu0 0.0
    %980 = vmatprep.subr.mxu0 0.0
    %981 = vmatpush2.msra.mxu0 0.0
    %982 = vmatprep.subr.mxu0 0.0
    %983 = vmatpush2.msra.mxu0 0.0
    %984 = vmatprep.subr.mxu0 0.0
    %985 = vmatpush2.msra.mxu0 0.0
    %986 = vmatprep.subr.mxu0 0.0
    %987 = vmatpush2.msra.mxu0 0.0
    %988 = vmatprep.mubr.f32.mxu0 0.0
    %989 = vmatmul.mubr.f32.gmra.mxu0 %v906
    %v990 = vpop.f32.mrf.mxu0
    %v991 = vadd.f32 %v923, %v990
    %v992 = vpop.f32.mrf.mxu0
    %993 = vdwg.mxu0
    %994 = vst [vmem:[#allocation14] sm:$0x1] %v991
    // Predicated region
    $region62: #{forward.1} parent=1 // pred_check
      _
    $region63: #{forward.1} parent=1 // pred_check_branch
      %996 = sbr.rel (0) target = $region65
    $region64: #{forward.1} parent=1 // pred_region
      %s998 = ssub.s32 16, 16
      %999 = vsyncadd [#allocation5], %s998
      %s1001 = sshll.u32 [#allocation14], 4
      %s1002 = int_to_ptr.vmem [resolvable:$true] %s1001
      %1004 = dma.vmem_to_hbm [thread:$0]  %s1002, 16, %s9, [#allocation5]
    $region65: #{forward.1} parent=1 // pred_fallthru
      _
    // Predicated region
    $region66: #{forward.1} parent=1 // pred_check
      _
    $region67: #{forward.1} parent=1 // pred_check_branch
      %1006 = sbr.rel (0) target = $region69
    $region68: #{forward.1} parent=1 // pred_region
      %1007 = dma.done [#allocation5], 16
    $region69: #{forward.1} parent=1 // pred_fallthru
      _
    %1008 = vsyncpa [#allocation4], 1
    %1009 = vsyncpa [#allocation7], 1
    %1010 = vsyncpa [#allocation10], 1
    %1011 = vsyncpa [#allocation13], 1
    %1012 = vsyncpa [#allocation5], 1

</llo_original>
